<compile_context>
chip_gen: v6e
topology: v6e:2x2x1
jax: 0.10.0
libtpu: 0.0.40
codegen_flags: <defaults>
</compile_context>

<pallas_src>
import jax
import jax.numpy as jnp
from jax.experimental import pallas as pl
from jax.experimental.pallas import tpu as pltpu


def _round_up(x, m):
    return ((x + m - 1) // m) * m


def mlp_kernel(x_ref, w1_ref, b1_ref, w2_ref, b2_ref, o_ref, h_ref):
    # fc1: (TM, ns) @ (ns, 2ns) -> f32 accumulation on the MXU (bf16 operands)
    h = jnp.dot(x_ref[...].astype(jnp.bfloat16), w1_ref[...],
                preferred_element_type=jnp.float32)
    # bias + ReLU in f32 (VPU); keep the activation in an explicit VMEM scratch
    h_ref[...] = jnp.maximum(h + b1_ref[...], 0.0)
    # fc2: (TM, 2ns) @ (2ns, 3ns) -> f32 accumulation on the MXU
    y = jnp.dot(h_ref[...].astype(jnp.bfloat16), w2_ref[...],
                preferred_element_type=jnp.float32)
    o_ref[...] = (y + b2_ref[...]).astype(o_ref.dtype)


def network_forward(x, w1, b1, w2, b2, ns, *, block_m=256):
    """Equivalent of Network.forward: fc1 -> ReLU -> fc2 -> view(-1, 3, ns)."""
    B = x.shape[0]

    # Batch tile: sublane-aligned, big enough to feed the MXU, but never bigger
    # than the (padded) batch itself.
    tm = max(8, min(_round_up(block_m, 8), _round_up(B, 8)))
    b_pad = _round_up(B, tm)
    if b_pad != B:
        x = jnp.pad(x, ((0, b_pad - B), (0, 0)))
    grid = (b_pad // tm,)

    # bf16 weights: half the HBM streaming bytes, full bf16 MXU rate.
    w1b = w1.astype(jnp.bfloat16)
    w2b = w2.astype(jnp.bfloat16)
    b1f = b1.astype(jnp.float32)
    b2f = b2.astype(jnp.float32)

    # Cost hint for XLA's scheduler around the custom call.
    flops = 2 * b_pad * ns * (2 * ns) + 2 * b_pad * (2 * ns) * (3 * ns)
    bytes_accessed = (w1b.size * 2 + w2b.size * 2
                      + b1f.size * 4 + b2f.size * 4
                      + b_pad * ns * 4 + b_pad * 3 * ns * 4)

    # VMEM plan (budgeted against v7x's 64 MiB physical VMEM):
    #   resident bf16 weights + f32 biases
    #   + double-buffered x / out tiles + f32 h scratch.
    resident = w1b.size * 2 + w2b.size * 2 + b1f.size * 4 + b2f.size * 4
    per_step = 2 * (tm * ns * 4 + tm * 3 * ns * 4) + tm * 2 * ns * 4
    vmem_limit = min(int(1.5 * (resident + per_step)) + (4 << 20), 64 << 20)

    out = pl.pallas_call(
        mlp_kernel,
        out_shape=jax.ShapeDtypeStruct((b_pad, 3 * ns), jnp.float32),
        grid_spec=pltpu.PrefetchScalarGridSpec(
            num_scalar_prefetch=0,
            grid=grid,
            in_specs=[
                pl.BlockSpec((tm, ns), lambda i: (i, 0)),          # x: batch-tiled
                pl.BlockSpec((ns, 2 * ns), lambda i: (0, 0)),      # w1: VMEM-resident
                pl.BlockSpec((1, 2 * ns), lambda i: (0, 0)),       # b1: VMEM-resident
                pl.BlockSpec((2 * ns, 3 * ns), lambda i: (0, 0)),  # w2: VMEM-resident
                pl.BlockSpec((1, 3 * ns), lambda i: (0, 0)),       # b2: VMEM-resident
            ],
            out_specs=pl.BlockSpec((tm, 3 * ns), lambda i: (i, 0)),
            scratch_shapes=[pltpu.VMEM((tm, 2 * ns), jnp.float32)],
        ),
        compiler_params=pltpu.CompilerParams(
            dimension_semantics=("parallel",),
            vmem_limit_bytes=vmem_limit),
        cost_estimate=pl.CostEstimate(
            flops=flops, transcendentals=0, bytes_accessed=bytes_accessed),
    )(x, w1b, b1f, w2b, b2f)

    out = out[:B]
    return out.reshape(-1, 3, ns)   # view(-1, 3, ns)


def init_params(key, ns):
    """Deterministic init mimicking nn.Linear default (uniform +/- 1/sqrt(fan_in)).
    Weights stored as (in, out) = PyTorch weight transposed."""
    k1, k2, k3, k4 = jax.random.split(key, 4)
    bound1 = 1.0 / jnp.sqrt(ns)
    w1 = jax.random.uniform(k1, (ns, 2 * ns), jnp.float32, -bound1, bound1)
    b1 = jax.random.uniform(k2, (1, 2 * ns), jnp.float32, -bound1, bound1)
    bound2 = 1.0 / jnp.sqrt(2 * ns)
    w2 = jax.random.uniform(k3, (2 * ns, 3 * ns), jnp.float32, -bound2, bound2)
    b2 = jax.random.uniform(k4, (1, 3 * ns), jnp.float32, -bound2, bound2)
    return w1, b1, w2, b2


if __name__ == "__main__":
    ns = 128   # module default; lane-aligned
    B = 20     # not a multiple of 8: exercises batch padding + multi-step grid

    key = jax.random.PRNGKey(0)
    kx, kp = jax.random.split(key)
    x = jax.random.normal(kx, (B, ns), jnp.float32)
    w1, b1, w2, b2 = init_params(kp, ns)

    # small block_m so the grid has several batch tiles even at this tiny B
    out = network_forward(x, w1, b1, w2, b2, ns, block_m=8)
    out = jax.block_until_ready(out)
    assert out.shape == (B, 3, ns), out.shape

    # reference in plain JAX, with the same bf16-operand / f32-accumulate recipe
    xb = x.astype(jnp.bfloat16)
    w1b = w1.astype(jnp.bfloat16)
    w2b = w2.astype(jnp.bfloat16)
    h = jnp.maximum(
        jnp.dot(xb, w1b, preferred_element_type=jnp.float32) + b1, 0.0)
    ref = jnp.dot(h.astype(jnp.bfloat16), w2b,
                  preferred_element_type=jnp.float32) + b2
    ref = ref.reshape(-1, 3, ns)
    assert jnp.allclose(out, ref, atol=1e-2, rtol=1e-2), (
        float(jnp.max(jnp.abs(out - ref))))

    # sanity vs. full-f32 math (looser tolerance for the bf16 weight cast)
    ref32 = (jnp.maximum(x @ w1 + b1, 0.0) @ w2 + b2).reshape(-1, 3, ns)
    assert jnp.allclose(out, ref32, atol=5e-2, rtol=5e-2)

    print("KERNEL_OK")
</pallas_src>

<mosaic_0001>
module attributes {stable_mosaic.version = 11 : i64} {
  func.func @mlp_kernel(%arg0: i32, %arg1: memref<8x128xf32, #tpu.memory_space<vmem>>, %arg2: memref<128x256xbf16, #tpu.memory_space<vmem>>, %arg3: memref<1x256xf32, #tpu.memory_space<vmem>>, %arg4: memref<256x384xbf16, #tpu.memory_space<vmem>>, %arg5: memref<1x384xf32, #tpu.memory_space<vmem>>, %arg6: memref<8x384xf32, #tpu.memory_space<vmem>>, %arg7: memref<8x256xf32, #tpu.memory_space<vmem>>) attributes {dimension_semantics = [#tpu.dimension_semantics<parallel>], iteration_bounds = array<i64: 3>, scalar_prefetch = 0 : i64, scratch_operands = 1 : i64, tpu.core_type = #tpu.core_type<tc>, window_params = [{transform_indices = @transform_0, window_bounds = array<i64: 8, 128>}, {pipeline_mode = #tpu.pipeline_mode<synchronous>, transform_indices = @transform_1, window_bounds = array<i64: 128, 256>}, {pipeline_mode = #tpu.pipeline_mode<synchronous>, transform_indices = @transform_2, window_bounds = array<i64: 1, 256>}, {pipeline_mode = #tpu.pipeline_mode<synchronous>, transform_indices = @transform_3, window_bounds = array<i64: 256, 384>}, {pipeline_mode = #tpu.pipeline_mode<synchronous>, transform_indices = @transform_4, window_bounds = array<i64: 1, 384>}, {transform_indices = @transform_5, window_bounds = array<i64: 8, 384>}]} {
    %c0 = arith.constant 0 : index
    %c0_0 = arith.constant 0 : index
    %0 = vector.load %arg1[%c0, %c0_0] : memref<8x128xf32, #tpu.memory_space<vmem>>, vector<8x128xf32>
    %1 = arith.truncf %0 : vector<8x128xf32> to vector<8x128xbf16>
    %c0_1 = arith.constant 0 : index
    %c0_2 = arith.constant 0 : index
    %2 = vector.load %arg2[%c0_1, %c0_2] : memref<128x256xbf16, #tpu.memory_space<vmem>>, vector<128x256xbf16>
    %cst = arith.constant dense<0.000000e+00> : vector<8x256xf32>
    %3 = tpu.matmul %1, %2, %cst {dimension_numbers = #tpu.dot_dimension_numbers<[1], [0], [0], [1], [0, 0, 1, 1], [], []>} : vector<8x128xbf16>, vector<128x256xbf16>, vector<8x256xf32> -> vector<8x256xf32>
    %c0_3 = arith.constant 0 : index
    %c0_4 = arith.constant 0 : index
    %4 = vector.load %arg3[%c0_3, %c0_4] : memref<1x256xf32, #tpu.memory_space<vmem>>, vector<1x256xf32>
    %5 = vector.broadcast %4 : vector<1x256xf32> to vector<8x256xf32>
    %6 = arith.addf %3, %5 : vector<8x256xf32>
    %cst_5 = arith.constant 0.000000e+00 : f32
    %7 = vector.broadcast %cst_5 : f32 to vector<8x256xf32>
    %8 = arith.maximumf %6, %7 : vector<8x256xf32>
    %c0_6 = arith.constant 0 : index
    %c0_7 = arith.constant 0 : index
    %9 = vector.load %arg7[%c0_6, %c0_7] : memref<8x256xf32, #tpu.memory_space<vmem>>, vector<8x256xf32>
    tpu.vector_store %arg7[%c0_6, %c0_7], %8 {strides = array<i32>} : memref<8x256xf32, #tpu.memory_space<vmem>>, vector<8x256xf32>,
    %c0_8 = arith.constant 0 : index
    %c0_9 = arith.constant 0 : index
    %10 = vector.load %arg7[%c0_8, %c0_9] : memref<8x256xf32, #tpu.memory_space<vmem>>, vector<8x256xf32>
    %11 = arith.truncf %10 : vector<8x256xf32> to vector<8x256xbf16>
    %c0_10 = arith.constant 0 : index
    %c0_11 = arith.constant 0 : index
    %12 = vector.load %arg4[%c0_10, %c0_11] : memref<256x384xbf16, #tpu.memory_space<vmem>>, vector<256x384xbf16>
    %cst_12 = arith.constant dense<0.000000e+00> : vector<8x384xf32>
    %13 = tpu.matmul %11, %12, %cst_12 {dimension_numbers = #tpu.dot_dimension_numbers<[1], [0], [0], [1], [0, 0, 1, 1], [], []>} : vector<8x256xbf16>, vector<256x384xbf16>, vector<8x384xf32> -> vector<8x384xf32>
    %c0_13 = arith.constant 0 : index
    %c0_14 = arith.constant 0 : index
    %14 = vector.load %arg5[%c0_13, %c0_14] : memref<1x384xf32, #tpu.memory_space<vmem>>, vector<1x384xf32>
    %15 = vector.broadcast %14 : vector<1x384xf32> to vector<8x384xf32>
    %16 = arith.addf %13, %15 : vector<8x384xf32>
    %c0_15 = arith.constant 0 : index
    %c0_16 = arith.constant 0 : index
    %17 = vector.load %arg6[%c0_15, %c0_16] : memref<8x384xf32, #tpu.memory_space<vmem>>, vector<8x384xf32>
    tpu.vector_store %arg6[%c0_15, %c0_16], %16 {strides = array<i32>} : memref<8x384xf32, #tpu.memory_space<vmem>>, vector<8x384xf32>,
    return
  }
  func.func @transform_0(%arg0: i32) -> (i32, i32) {
    %c0_i32 = arith.constant 0 : i32
    %c0_i32_0 = arith.constant 0 : i32
    return %arg0, %c0_i32 : i32, i32
  }
  func.func @transform_1(%arg0: i32) -> (i32, i32) {
    %c0_i32 = arith.constant 0 : i32
    %c0_i32_0 = arith.constant 0 : i32
    %c0_i32_1 = arith.constant 0 : i32
    return %c0_i32, %c0_i32_0 : i32, i32
  }
  func.func @transform_2(%arg0: i32) -> (i32, i32) {
    %c0_i32 = arith.constant 0 : i32
    %c0_i32_0 = arith.constant 0 : i32
    %c0_i32_1 = arith.constant 0 : i32
    return %c0_i32, %c0_i32_0 : i32, i32
  }
  func.func @transform_3(%arg0: i32) -> (i32, i32) {
    %c0_i32 = arith.constant 0 : i32
    %c0_i32_0 = arith.constant 0 : i32
    %c0_i32_1 = arith.constant 0 : i32
    return %c0_i32, %c0_i32_0 : i32, i32
  }
  func.func @transform_4(%arg0: i32) -> (i32, i32) {
    %c0_i32 = arith.constant 0 : i32
    %c0_i32_0 = arith.constant 0 : i32
    %c0_i32_1 = arith.constant 0 : i32
    return %c0_i32, %c0_i32_0 : i32, i32
  }
  func.func @transform_5(%arg0: i32) -> (i32, i32) {
    %c0_i32 = arith.constant 0 : i32
    %c0_i32_0 = arith.constant 0 : i32
    return %arg0, %c0_i32 : i32, i32
  }
}

</mosaic_0001>

<llo_original>
// kernel: tpu_custom_call.1
$region0: #{tpu_custom_call.1}
  #allocation0 [shape = 'u32[]', space=smem, size = 0x4, offset = 0x4, fixed_abs, tag = 'smem constant byte address 0x4 - core index']
  #allocation1 [shape = 'u32[144,128]{1,0:T(1,128)}', space=vmem, size = 0x12000, scoped, tag = 'internal scratch']
  #allocation2 [shape = 'f32[8,256]{1,0:T(8,128)}', space=vmem, size = 0x2000, scoped, tag = 'scratch operand']
  %s0 = inlined_call_operand.hbm [shape: f32[24,128], index: 0, kind: input, shape index: {}]
  %s1 = inlined_call_operand.hbm [shape: bf16[128,256], index: 1, kind: input, shape index: {}]
  %s2 = inlined_call_operand.vmem [shape: f32[1,256], index: 2, kind: input, shape index: {}]
  %s3 = inlined_call_operand.hbm [shape: bf16[256,384], index: 3, kind: input, shape index: {}]
  %s4 = inlined_call_operand.vmem [shape: f32[1,384], index: 4, kind: input, shape index: {}]
  %s5 = inlined_call_operand.hbm [shape: f32[24,384], index: 5, kind: output, shape index: {}]
  %s6 = sld [smem:[#allocation0]]
  $region65: #{tpu_custom_call.1} parent=0
    _
  %s8 = ssub.s32 1, %s6
  %s9 = scalar_select 0, %s8, %s6
  $region1: #{tpu_custom_call.1} parent=0
    #allocation3 [shape = 'u8[8192]{0}', space=vmem, size = 0x2000, scoped, tag = 'input window, operand 0']
    #allocation4 [shape = 's32[2]{0}', space=sflag, size = 0x8, scoped, tag = 'scoped memory for tpu_custom_call.1']
    #allocation5 [shape = 's32[2]{0}', space=sflag, size = 0x8, scoped, tag = 'scoped memory for tpu_custom_call.1']
    #allocation6 [shape = 'u8[65536]{0}', space=vmem, size = 0x10000, scoped, tag = 'input window, operand 1, single buffered']
    #allocation7 [shape = 's32[1]{0}', space=sflag, size = 0x4, scoped, tag = 'scoped memory for tpu_custom_call.1']
    #allocation8 [shape = 'u8[196608]{0}', space=vmem, size = 0x30000, scoped, tag = 'input window, operand 3, single buffered']
    #allocation9 [shape = 'u8[24576]{0}', space=vmem, size = 0x6000, scoped, tag = 'output window, operand 0']
    %10 = vsyncpa [#allocation4], 0
    %s11 = scalar_lea.sflag [#allocation4], 1
    %12 = vsyncpa %s11, 0
    %13 = vsyncpa [#allocation7], 0
    %14 = vsyncpa [#allocation5], 0
    %s15 = scalar_lea.sflag [#allocation5], 1
    %16 = vsyncpa %s15, 0
    loop: start=0, step=1, limit=5
    $region2: #{tpu_custom_call.1} parent=1 // loop_pre_header
      _
    $region3: #{tpu_custom_call.1} parent=1 // loop_header
      %s18 = sphi 0, %s22
      %p19 = scmp.ge.s32.totalorder %s18, 5
      %s28 = sphi 0, %s30
      %s31 = sphi 0, %s28
      %s32 = sphi 0, %s31
      %s48 = sphi 0, %s32
      %s52 = sphi 0, %s52
      %s54 = sphi 0, %s52
      %s55 = sphi 0, %s54
      %s69 = sphi 0, %s55
      %s73 = sphi 0, %s73
      %s75 = sphi 0, %s73
      %s76 = sphi 0, %s75
      %s90 = sphi 0, %s76
      %s94 = sphi 0, %s94
      %s96 = sphi 0, %s94
      %s97 = sphi 0, %s96
      %s111 = sphi 0, %s97
      %s115 = sphi 0, %s115
      %s117 = sphi 0, %s115
      %s118 = sphi 0, %s117
      %s132 = sphi 0, %s118
      %s138 = sphi 0, %s140
      %s141 = sphi 0, %s138
      %s142 = sphi 0, %s141
      %s158 = sphi 0, %s142
    $region4: #{tpu_custom_call.1} parent=1 // loop_header_branch
      %21 = sbr.rel (%p19) target = $region8
    $region5: #{tpu_custom_call.1} parent=1 // loop_body
      %s23 = ssub.s32 %s18, 1
      %s24 = ssub.s32 %s18, 2
      %s25 = sadd.s32 %s18, 1
      %s26 = ssub.s32 %s18, %s25
      %p27 = scmp.eq.s32.totalorder %s26, 0
      %s29 = sadd.s32 %s28, 1
      %s30 = scalar_select %p27, %s28, %s29
      %p33 = pneg %p27
      %p34 = scmp.eq.s32.totalorder %s18, 2
      %p35 = por %p33, %p34
      %p36 = scmp.ne.s32.totalorder %s28, %s31
      %p37 = scmp.eq.s32.totalorder %s18, 0
      %p38 = por %p36, %p37
      %p39 = scmp.ne.s32.totalorder %s28, %s31
      %p40 = scmp.eq.s32.totalorder %s23, 2
      %p41 = por %p39, %p40
      %p42 = scmp.ne.s32.totalorder %s31, %s32
      %p43 = scmp.eq.s32.totalorder %s23, 0
      %p44 = por %p42, %p43
      %p45 = scmp.ne.s32.totalorder %s31, %s32
      %p46 = scmp.eq.s32.totalorder %s24, 2
      %p47 = por %p45, %p46
      %p49 = scmp.ne.s32.totalorder %s32, %s48
      %p50 = scmp.eq.s32.totalorder %s24, 0
      %p51 = por %p49, %p50
      %s53 = sadd.s32 %s52, 1
      %p56 = scmp.eq.s32.totalorder %s18, 2
      %p57 = scmp.ne.s32.totalorder %s52, %s54
      %p58 = scmp.eq.s32.totalorder %s18, 0
      %p59 = por %p57, %p58
      %p60 = scmp.ne.s32.totalorder %s52, %s54
      %p61 = scmp.eq.s32.totalorder %s23, 2
      %p62 = por %p60, %p61
      %p63 = scmp.ne.s32.totalorder %s54, %s55
      %p64 = scmp.eq.s32.totalorder %s23, 0
      %p65 = por %p63, %p64
      %p66 = scmp.ne.s32.totalorder %s54, %s55
      %p67 = scmp.eq.s32.totalorder %s24, 2
      %p68 = por %p66, %p67
      %p70 = scmp.ne.s32.totalorder %s55, %s69
      %p71 = scmp.eq.s32.totalorder %s24, 0
      %p72 = por %p70, %p71
      %s74 = sadd.s32 %s73, 1
      %p77 = scmp.eq.s32.totalorder %s18, 2
      %p78 = scmp.ne.s32.totalorder %s73, %s75
      %p79 = scmp.eq.s32.totalorder %s18, 0
      %p80 = por %p78, %p79
      %p81 = scmp.ne.s32.totalorder %s73, %s75
      %p82 = scmp.eq.s32.totalorder %s23, 2
      %p83 = por %p81, %p82
      %p84 = scmp.ne.s32.totalorder %s75, %s76
      %p85 = scmp.eq.s32.totalorder %s23, 0
      %p86 = por %p84, %p85
      %p87 = scmp.ne.s32.totalorder %s75, %s76
      %p88 = scmp.eq.s32.totalorder %s24, 2
      %p89 = por %p87, %p88
      %p91 = scmp.ne.s32.totalorder %s76, %s90
      %p92 = scmp.eq.s32.totalorder %s24, 0
      %p93 = por %p91, %p92
      %s95 = sadd.s32 %s94, 1
      %p98 = scmp.eq.s32.totalorder %s18, 2
      %p99 = scmp.ne.s32.totalorder %s94, %s96
      %p100 = scmp.eq.s32.totalorder %s18, 0
      %p101 = por %p99, %p100
      %p102 = scmp.ne.s32.totalorder %s94, %s96
      %p103 = scmp.eq.s32.totalorder %s23, 2
      %p104 = por %p102, %p103
      %p105 = scmp.ne.s32.totalorder %s96, %s97
      %p106 = scmp.eq.s32.totalorder %s23, 0
      %p107 = por %p105, %p106
      %p108 = scmp.ne.s32.totalorder %s96, %s97
      %p109 = scmp.eq.s32.totalorder %s24, 2
      %p110 = por %p108, %p109
      %p112 = scmp.ne.s32.totalorder %s97, %s111
      %p113 = scmp.eq.s32.totalorder %s24, 0
      %p114 = por %p112, %p113
      %s116 = sadd.s32 %s115, 1
      %p119 = scmp.eq.s32.totalorder %s18, 2
      %p120 = scmp.ne.s32.totalorder %s115, %s117
      %p121 = scmp.eq.s32.totalorder %s18, 0
      %p122 = por %p120, %p121
      %p123 = scmp.ne.s32.totalorder %s115, %s117
      %p124 = scmp.eq.s32.totalorder %s23, 2
      %p125 = por %p123, %p124
      %p126 = scmp.ne.s32.totalorder %s117, %s118
      %p127 = scmp.eq.s32.totalorder %s23, 0
      %p128 = por %p126, %p127
      %p129 = scmp.ne.s32.totalorder %s117, %s118
      %p130 = scmp.eq.s32.totalorder %s24, 2
      %p131 = por %p129, %p130
      %p133 = scmp.ne.s32.totalorder %s118, %s132
      %p134 = scmp.eq.s32.totalorder %s24, 0
      %p135 = por %p133, %p134
      %s136 = ssub.s32 %s18, %s25
      %p137 = scmp.eq.s32.totalorder %s136, 0
      %s139 = sadd.s32 %s138, 1
      %s140 = scalar_select %p137, %s138, %s139
      %p143 = pneg %p137
      %p144 = scmp.eq.s32.totalorder %s18, 2
      %p145 = por %p143, %p144
      %p146 = scmp.ne.s32.totalorder %s138, %s141
      %p147 = scmp.eq.s32.totalorder %s18, 0
      %p148 = por %p146, %p147
      %p149 = scmp.ne.s32.totalorder %s138, %s141
      %p150 = scmp.eq.s32.totalorder %s23, 2
      %p151 = por %p149, %p150
      %p152 = scmp.ne.s32.totalorder %s141, %s142
      %p153 = scmp.eq.s32.totalorder %s23, 0
      %p154 = por %p152, %p153
      %p155 = scmp.ne.s32.totalorder %s141, %s142
      %p156 = scmp.eq.s32.totalorder %s24, 2
      %p157 = por %p155, %p156
      %p159 = scmp.ne.s32.totalorder %s142, %s158
      %p160 = scmp.eq.s32.totalorder %s24, 0
      %p161 = por %p159, %p160
      %p162 = scmp.le.s32.totalorder 1, %s18
      %p163 = scmp.lt.s32.totalorder %s18, 4
      %p164 = pnand %p162, %p163
      %p165 = pneg %p164
      // Predicated region
      $region9: #{tpu_custom_call.1} parent=5 // pred_check
        _
      $region10: #{tpu_custom_call.1} parent=5 // pred_check_branch
        %167 = sbr.rel (%p164) target = $region12
      $region11: #{tpu_custom_call.1} parent=5 // pred_region
        %s168 = ssub.s32 %s18, 1
        // Predicated region
        $region13: #{tpu_custom_call.1} parent=11 // pred_check
          %p169 = pneg %p65
        $region14: #{tpu_custom_call.1} parent=11 // pred_check_branch
          %171 = sbr.rel (%p169) target = $region16
        $region15: #{tpu_custom_call.1} parent=11 // pred_region
          %s173 = ssub.s32 2048, 2048
          %174 = vsyncadd [#allocation7], %s173
          %s175 = sshll.u32 [#allocation6], 4
          %s176 = int_to_ptr.vmem [resolvable:$true] %s175
          %181 = dma.hbm_to_vmem [thread:$0]  %s1, 2048, %s176, [#allocation7], 128, 128, 8
        $region16: #{tpu_custom_call.1} parent=11 // pred_fallthru
          _
        // Predicated region
        $region17: #{tpu_custom_call.1} parent=11 // pred_check
          %p182 = pneg %p86
        $region18: #{tpu_custom_call.1} parent=11 // pred_check_branch
          %184 = sbr.rel (%p182) target = $region20
        $region19: #{tpu_custom_call.1} parent=11 // pred_region
          _
        $region20: #{tpu_custom_call.1} parent=11 // pred_fallthru
          _
        // Predicated region
        $region21: #{tpu_custom_call.1} parent=11 // pred_check
          %p185 = pneg %p107
        $region22: #{tpu_custom_call.1} parent=11 // pred_check_branch
          %187 = sbr.rel (%p185) target = $region24
        $region23: #{tpu_custom_call.1} parent=11 // pred_region
          %s189 = ssub.s32 6144, 6144
          %190 = vsyncadd [#allocation7], %s189
          %s191 = sshll.u32 [#allocation8], 4
          %s192 = int_to_ptr.vmem [resolvable:$true] %s191
          %197 = dma.hbm_to_vmem [thread:$0]  %s3, 6144, %s192, [#allocation7], 192, 192, 12
        $region24: #{tpu_custom_call.1} parent=11 // pred_fallthru
          _
        // Predicated region
        $region25: #{tpu_custom_call.1} parent=11 // pred_check
          %p198 = pneg %p128
        $region26: #{tpu_custom_call.1} parent=11 // pred_check_branch
          %200 = sbr.rel (%p198) target = $region28
        $region27: #{tpu_custom_call.1} parent=11 // pred_region
          _
        $region28: #{tpu_custom_call.1} parent=11 // pred_fallthru
          _
      $region12: #{tpu_custom_call.1} parent=5 // pred_fallthru
        _
      %p201 = scmp.lt.s32.totalorder %s18, 3
      // Predicated region
      $region29: #{tpu_custom_call.1} parent=5 // pred_check
        %p202 = pneg %p201
      $region30: #{tpu_custom_call.1} parent=5 // pred_check_branch
        %204 = sbr.rel (%p202) target = $region32
      $region31: #{tpu_custom_call.1} parent=5 // pred_region
        // Predicated region
        $region33: #{tpu_custom_call.1} parent=31 // pred_check
          %p205 = pneg %p38
        $region34: #{tpu_custom_call.1} parent=31 // pred_check_branch
          %207 = sbr.rel (%p205) target = $region36
        $region35: #{tpu_custom_call.1} parent=31 // pred_region
          %s208 = sand.u32 %s28, 1
          %s209 = scalar_lea.sflag [#allocation4], %s208
          %s210 = sand.u32 %s28, 1
          %s211 = smul.addr %s210, 8
          %s212 = scalar_lea.vmem [#allocation3], %s211
          %s214 = ssub.s32 128, 128
          %215 = vsyncadd %s209, %s214
          %s216 = smul.addr %s18, 128
          %s217 = scalar_lea.hbm %s0, %s216
          %s219 = sshll.u32 %s212, 4
          %s220 = int_to_ptr.vmem [resolvable:$true] %s219
          %222 = dma.hbm_to_vmem [thread:$0]  %s217, 128, %s220, %s209
        $region36: #{tpu_custom_call.1} parent=31 // pred_fallthru
          _
      $region32: #{tpu_custom_call.1} parent=5 // pred_fallthru
        _
      %p223 = scmp.le.s32.totalorder 1, %s18
      %p224 = scmp.lt.s32.totalorder %s18, 4
      %p225 = pnand %p223, %p224
      %p226 = pneg %p225
      // Predicated region
      $region37: #{tpu_custom_call.1} parent=5 // pred_check
        _
      $region38: #{tpu_custom_call.1} parent=5 // pred_check_branch
        %228 = sbr.rel (%p225) target = $region40
      $region39: #{tpu_custom_call.1} parent=5 // pred_region
        %s229 = ssub.s32 %s18, 1
        %s230 = sand.u32 %s31, 1
        %s231 = scalar_lea.sflag [#allocation4], %s230
        %s232 = sand.u32 %s31, 1
        %s233 = smul.addr %s232, 8
        %s234 = scalar_lea.vmem [#allocation3], %s233
        // Predicated region
        $region41: #{tpu_custom_call.1} parent=39 // pred_check
          %p235 = pneg %p44
        $region42: #{tpu_custom_call.1} parent=39 // pred_check_branch
          %237 = sbr.rel (%p235) target = $region44
        $region43: #{tpu_custom_call.1} parent=39 // pred_region
          %238 = dma.done %s231, 128
        $region44: #{tpu_custom_call.1} parent=39 // pred_fallthru
          _
        // Predicated region
        $region45: #{tpu_custom_call.1} parent=39 // pred_check
          %p239 = pneg %p65
        $region46: #{tpu_custom_call.1} parent=39 // pred_check_branch
          %241 = sbr.rel (%p239) target = $region48
        $region47: #{tpu_custom_call.1} parent=39 // pred_region
          %242 = dma.done [#allocation7], 2048
        $region48: #{tpu_custom_call.1} parent=39 // pred_fallthru
          _
        // Predicated region
        $region49: #{tpu_custom_call.1} parent=39 // pred_check
          %p243 = pneg %p107
        $region50: #{tpu_custom_call.1} parent=39 // pred_check_branch
          %245 = sbr.rel (%p243) target = $region52
        $region51: #{tpu_custom_call.1} parent=39 // pred_region
          %246 = dma.done [#allocation7], 6144
        $region52: #{tpu_custom_call.1} parent=39 // pred_fallthru
          _
        %s247 = sand.u32 %s31, 1
        %s248 = scalar_lea.sflag [#allocation4], %s247
        %s249 = sand.u32 %s31, 1
        %s250 = smul.addr %s249, 8
        %s251 = scalar_lea.vmem [#allocation3], %s250
        %p252 = pneg %p44
        %p253 = pneg %p41
        %p254 = pneg %p65
        %p255 = pneg %p62
        %p256 = pneg %p86
        %p257 = pneg %p83
        %p258 = pneg %p107
        %p259 = pneg %p104
        %p260 = pneg %p128
        %p261 = pneg %p125
        %p262 = pneg %p154
        %p263 = pneg %p151
        %s264 = sand.u32 %s141, 1
        %s265 = scalar_lea.sflag [#allocation5], %s264
        %s266 = sand.u32 %s141, 1
        %s267 = smul.addr %s266, 24
        %s268 = scalar_lea.vmem [#allocation9], %s267
        %v270 = vld [vmem:[%s234] sm:$0xff]
        %v271 = vpack.c.bf16 %v270, %v270
        %v272 = vld [vmem:[#allocation6] sm:$0xff]
        %v273 = vld [vmem:[#allocation6 + $0x8] sm:$0xff]
        %v274 = vld [vmem:[#allocation6 + $0x10] sm:$0xff]
        %v275 = vld [vmem:[#allocation6 + $0x18] sm:$0xff]
        %v276 = vld [vmem:[#allocation6 + $0x20] sm:$0xff]
        %v277 = vld [vmem:[#allocation6 + $0x28] sm:$0xff]
        %v278 = vld [vmem:[#allocation6 + $0x30] sm:$0xff]
        %v279 = vld [vmem:[#allocation6 + $0x38] sm:$0xff]
        %v280 = vld [vmem:[#allocation6 + $0x40] sm:$0xff]
        %v281 = vld [vmem:[#allocation6 + $0x48] sm:$0xff]
        %v282 = vld [vmem:[#allocation6 + $0x50] sm:$0xff]
        %v283 = vld [vmem:[#allocation6 + $0x58] sm:$0xff]
        %v284 = vld [vmem:[#allocation6 + $0x60] sm:$0xff]
        %v285 = vld [vmem:[#allocation6 + $0x68] sm:$0xff]
        %v286 = vld [vmem:[#allocation6 + $0x70] sm:$0xff]
        %v287 = vld [vmem:[#allocation6 + $0x78] sm:$0xff]
        %v288 = vld [vmem:[%s2] sm:$0x3]
        %v290 = vlaneseq
        %v291 = vshrl.u32 %v290, 7
        %v292 = vsub.s32 0, %v291
        %v293 = vrot.slane %v288, %v292
        %v294 = vlaneseq
        %v295 = vshrl.u32 %v294, 7
        %v296 = vsub.s32 1, %v295
        %v297 = vrot.slane %v288, %v296
        %v316 = vunpack.c.l.b16 %v272
        %v317 = vunpack.c.h.b16 %v272
        %v318 = vunpack.c.l.b16 %v273
        %v319 = vunpack.c.h.b16 %v273
        %v320 = vunpack.c.l.b16 %v274
        %v321 = vunpack.c.h.b16 %v274
        %v322 = vunpack.c.l.b16 %v275
        %v323 = vunpack.c.h.b16 %v275
        %v324 = vunpack.c.l.b16 %v276
        %v325 = vunpack.c.h.b16 %v276
        %v326 = vunpack.c.l.b16 %v277
        %v327 = vunpack.c.h.b16 %v277
        %v328 = vunpack.c.l.b16 %v278
        %v329 = vunpack.c.h.b16 %v278
        %v330 = vunpack.c.l.b16 %v279
        %v331 = vunpack.c.h.b16 %v279
        %v332 = vunpack.c.l.b16 %v280
        %v333 = vunpack.c.h.b16 %v280
        %v334 = vunpack.c.l.b16 %v281
        %v335 = vunpack.c.h.b16 %v281
        %v336 = vunpack.c.l.b16 %v282
        %v337 = vunpack.c.h.b16 %v282
        %v338 = vunpack.c.l.b16 %v283
        %v339 = vunpack.c.h.b16 %v283
        %v340 = vunpack.c.l.b16 %v284
        %v341 = vunpack.c.h.b16 %v284
        %v342 = vunpack.c.l.b16 %v285
        %v343 = vunpack.c.h.b16 %v285
        %v344 = vunpack.c.l.b16 %v286
        %v345 = vunpack.c.h.b16 %v286
        %v346 = vunpack.c.l.b16 %v287
        %v347 = vunpack.c.h.b16 %v287
        %v348 = vpack.c.b16 %v318, %v316
        %v349 = vpack.c.b16 %v319, %v317
        %v350 = vpack.c.b16 %v322, %v320
        %v351 = vpack.c.b16 %v323, %v321
        %v352 = vpack.c.b16 %v326, %v324
        %v353 = vpack.c.b16 %v327, %v325
        %v354 = vpack.c.b16 %v330, %v328
        %v355 = vpack.c.b16 %v331, %v329
        %v356 = vpack.c.b16 %v334, %v332
        %v357 = vpack.c.b16 %v335, %v333
        %v358 = vpack.c.b16 %v338, %v336
        %v359 = vpack.c.b16 %v339, %v337
        %v360 = vpack.c.b16 %v342, %v340
        %v361 = vpack.c.b16 %v343, %v341
        %v362 = vpack.c.b16 %v346, %v344
        %v363 = vpack.c.b16 %v347, %v345
        %380 = vmatprep.subr.bf16.mxu0 %v363
        %381 = vmatpush1.bf16.msra.mxu0 %v362
        %382 = vmatprep.subr.bf16.mxu0 %v361
        %383 = vmatpush1.bf16.msra.mxu0 %v360
        %384 = vmatprep.subr.bf16.mxu0 %v359
        %385 = vmatpush1.bf16.msra.mxu0 %v358
        %386 = vmatprep.subr.bf16.mxu0 %v357
        %387 = vmatpush1.bf16.msra.mxu0 %v356
        %388 = vmatprep.subr.bf16.mxu0 %v355
        %389 = vmatpush1.bf16.msra.mxu0 %v354
        %390 = vmatprep.subr.bf16.mxu0 %v353
        %391 = vmatpush1.bf16.msra.mxu0 %v352
        %392 = vmatprep.subr.bf16.mxu0 %v351
        %393 = vmatpush1.bf16.msra.mxu0 %v350
        %394 = vmatprep.subr.bf16.mxu0 %v349
        %395 = vmatpush1.bf16.msra.mxu0 %v348
        %396 = vmatprep.subr.bf16.mxu0 0
        %397 = vmatpush2.bf16.msra.mxu0 0
        %398 = vmatprep.subr.bf16.mxu0 0
        %399 = vmatpush2.bf16.msra.mxu0 0
        %400 = vmatprep.subr.bf16.mxu0 0
        %401 = vmatpush2.bf16.msra.mxu0 0
        %402 = vmatprep.subr.bf16.mxu0 0
        %403 = vmatpush2.bf16.msra.mxu0 0
        %404 = vmatprep.subr.bf16.mxu0 0
        %405 = vmatpush2.bf16.msra.mxu0 0
        %406 = vmatprep.subr.bf16.mxu0 0
        %407 = vmatpush2.bf16.msra.mxu0 0
        %408 = vmatprep.subr.bf16.mxu0 0
        %409 = vmatpush2.bf16.msra.mxu0 0
        %410 = vmatprep.subr.bf16.mxu0 0
        %411 = vmatpush2.bf16.msra.mxu0 0
        %412 = vmatprep.mubr.bf16.mxu0 0
        %413 = vmatmul.mubr.bf16.gmra.mxu0 %v271
        %v414 = vpop.f32.mrf.mxu0
        %v415 = vadd.f32 %v293, %v414
        %v416 = vpop.f32.mrf.mxu0
        %v417 = vadd.f32 %v297, %v416
        %v418 = vpop.f32.mrf.mxu0
        %v419 = vpop.f32.mrf.mxu0
        %420 = vdwg.mxu0
        %v421 = vmax.f32 %v415, 0.0
        %v422 = vmax.f32 %v417, 0.0
        %423 = vst [vmem:[#allocation2] sm:$0xff] %v421
        %424 = vst [vmem:[#allocation2 + $0x8] sm:$0xff] %v422
        %v425 = vld [vmem:[#allocation2] sm:$0xff]
        %v426 = vld [vmem:[#allocation2 + $0x8] sm:$0xff]
        %v427 = vpack.c.bf16 %v425, %v425
        %v428 = vpack.c.bf16 %v426, %v426
        %v429 = vld [vmem:[#allocation8] sm:$0xff]
        %v430 = vld [vmem:[#allocation8 + $0x8] sm:$0xf]
        %v431 = vld [vmem:[#allocation8 + $0xc] sm:$0xff]
        %v432 = vld [vmem:[#allocation8 + $0x14] sm:$0xf]
        %v433 = vld [vmem:[#allocation8 + $0x18] sm:$0xff]
        %v434 = vld [vmem:[#allocation8 + $0x20] sm:$0xf]
        %v435 = vld [vmem:[#allocation8 + $0x24] sm:$0xff]
        %v436 = vld [vmem:[#allocation8 + $0x2c] sm:$0xf]
        %v437 = vld [vmem:[#allocation8 + $0x30] sm:$0xff]
        %v438 = vld [vmem:[#allocation8 + $0x38] sm:$0xf]
        %v439 = vld [vmem:[#allocation8 + $0x3c] sm:$0xff]
        %v440 = vld [vmem:[#allocation8 + $0x44] sm:$0xf]
        %v441 = vld [vmem:[#allocation8 + $0x48] sm:$0xff]
        %v442 = vld [vmem:[#allocation8 + $0x50] sm:$0xf]
        %v443 = vld [vmem:[#allocation8 + $0x54] sm:$0xff]
        %v444 = vld [vmem:[#allocation8 + $0x5c] sm:$0xf]
        %v445 = vld [vmem:[#allocation8 + $0x60] sm:$0xff]
        %v446 = vld [vmem:[#allocation8 + $0x68] sm:$0xf]
        %v447 = vld [vmem:[#allocation8 + $0x6c] sm:$0xff]
        %v448 = vld [vmem:[#allocation8 + $0x74] sm:$0xf]
        %v449 = vld [vmem:[#allocation8 + $0x78] sm:$0xff]
        %v450 = vld [vmem:[#allocation8 + $0x80] sm:$0xf]
        %v451 = vld [vmem:[#allocation8 + $0x84] sm:$0xff]
        %v452 = vld [vmem:[#allocation8 + $0x8c] sm:$0xf]
        %v453 = vld [vmem:[#allocation8 + $0x90] sm:$0xff]
        %v454 = vld [vmem:[#allocation8 + $0x98] sm:$0xf]
        %v455 = vld [vmem:[#allocation8 + $0x9c] sm:$0xff]
        %v456 = vld [vmem:[#allocation8 + $0xa4] sm:$0xf]
        %v457 = vld [vmem:[#allocation8 + $0xa8] sm:$0xff]
        %v458 = vld [vmem:[#allocation8 + $0xb0] sm:$0xf]
        %v459 = vld [vmem:[#allocation8 + $0xb4] sm:$0xff]
        %v460 = vld [vmem:[#allocation8 + $0xbc] sm:$0xf]
        %v461 = vld [vmem:[#allocation8 + $0xc0] sm:$0xff]
        %v462 = vld [vmem:[#allocation8 + $0xc8] sm:$0xf]
        %v463 = vld [vmem:[#allocation8 + $0xcc] sm:$0xff]
        %v464 = vld [vmem:[#allocation8 + $0xd4] sm:$0xf]
        %v465 = vld [vmem:[#allocation8 + $0xd8] sm:$0xff]
        %v466 = vld [vmem:[#allocation8 + $0xe0] sm:$0xf]
        %v467 = vld [vmem:[#allocation8 + $0xe4] sm:$0xff]
        %v468 = vld [vmem:[#allocation8 + $0xec] sm:$0xf]
        %v469 = vld [vmem:[#allocation8 + $0xf0] sm:$0xff]
        %v470 = vld [vmem:[#allocation8 + $0xf8] sm:$0xf]
        %v471 = vld [vmem:[#allocation8 + $0xfc] sm:$0xff]
        %v472 = vld [vmem:[#allocation8 + $0x104] sm:$0xf]
        %v473 = vld [vmem:[#allocation8 + $0x108] sm:$0xff]
        %v474 = vld [vmem:[#allocation8 + $0x110] sm:$0xf]
        %v475 = vld [vmem:[#allocation8 + $0x114] sm:$0xff]
        %v476 = vld [vmem:[#allocation8 + $0x11c] sm:$0xf]
        %v477 = vld [vmem:[#allocation8 + $0x120] sm:$0xff]
        %v478 = vld [vmem:[#allocation8 + $0x128] sm:$0xf]
        %v479 = vld [vmem:[#allocation8 + $0x12c] sm:$0xff]
        %v480 = vld [vmem:[#allocation8 + $0x134] sm:$0xf]
        %v481 = vld [vmem:[#allocation8 + $0x138] sm:$0xff]
        %v482 = vld [vmem:[#allocation8 + $0x140] sm:$0xf]
        %v483 = vld [vmem:[#allocation8 + $0x144] sm:$0xff]
        %v484 = vld [vmem:[#allocation8 + $0x14c] sm:$0xf]
        %v485 = vld [vmem:[#allocation8 + $0x150] sm:$0xff]
        %v486 = vld [vmem:[#allocation8 + $0x158] sm:$0xf]
        %v487 = vld [vmem:[#allocation8 + $0x15c] sm:$0xff]
        %v488 = vld [vmem:[#allocation8 + $0x164] sm:$0xf]
        %v489 = vld [vmem:[#allocation8 + $0x168] sm:$0xff]
        %v490 = vld [vmem:[#allocation8 + $0x170] sm:$0xf]
        %v491 = vld [vmem:[#allocation8 + $0x174] sm:$0xff]
        %v492 = vld [vmem:[#allocation8 + $0x17c] sm:$0xf]
        %v493 = vld [vmem:[%s4] sm:$0x7]
        %v495 = vlaneseq
        %v496 = vshrl.u32 %v495, 7
        %v497 = vsub.s32 0, %v496
        %v498 = vrot.slane %v493, %v497
        %v499 = vlaneseq
        %v500 = vshrl.u32 %v499, 7
        %v501 = vsub.s32 1, %v500
        %v502 = vrot.slane %v493, %v501
        %v503 = vlaneseq
        %v504 = vshrl.u32 %v503, 7
        %v505 = vsub.s32 2, %v504
        %v506 = vrot.slane %v493, %v505
        %v574 = vunpack.c.l.b16 %v429
        %v575 = vunpack.c.h.b16 %v429
        %v576 = vunpack.c.l.b16 %v430
        %v577 = vunpack.c.l.b16 %v431
        %v578 = vunpack.c.h.b16 %v431
        %v579 = vunpack.c.l.b16 %v432
        %v580 = vunpack.c.l.b16 %v433
        %v581 = vunpack.c.h.b16 %v433
        %v582 = vunpack.c.l.b16 %v434
        %v583 = vunpack.c.l.b16 %v435
        %v584 = vunpack.c.h.b16 %v435
        %v585 = vunpack.c.l.b16 %v436
        %v586 = vunpack.c.l.b16 %v437
        %v587 = vunpack.c.h.b16 %v437
        %v588 = vunpack.c.l.b16 %v438
        %v589 = vunpack.c.l.b16 %v439
        %v590 = vunpack.c.h.b16 %v439
        %v591 = vunpack.c.l.b16 %v440
        %v592 = vunpack.c.l.b16 %v441
        %v593 = vunpack.c.h.b16 %v441
        %v594 = vunpack.c.l.b16 %v442
        %v595 = vunpack.c.l.b16 %v443
        %v596 = vunpack.c.h.b16 %v443
        %v597 = vunpack.c.l.b16 %v444
        %v598 = vunpack.c.l.b16 %v445
        %v599 = vunpack.c.h.b16 %v445
        %v600 = vunpack.c.l.b16 %v446
        %v601 = vunpack.c.l.b16 %v447
        %v602 = vunpack.c.h.b16 %v447
        %v603 = vunpack.c.l.b16 %v448
        %v604 = vunpack.c.l.b16 %v449
        %v605 = vunpack.c.h.b16 %v449
        %v606 = vunpack.c.l.b16 %v450
        %v607 = vunpack.c.l.b16 %v451
        %v608 = vunpack.c.h.b16 %v451
        %v609 = vunpack.c.l.b16 %v452
        %v610 = vunpack.c.l.b16 %v453
        %v611 = vunpack.c.h.b16 %v453
        %v612 = vunpack.c.l.b16 %v454
        %v613 = vunpack.c.l.b16 %v455
        %v614 = vunpack.c.h.b16 %v455
        %v615 = vunpack.c.l.b16 %v456
        %v616 = vunpack.c.l.b16 %v457
        %v617 = vunpack.c.h.b16 %v457
        %v618 = vunpack.c.l.b16 %v458
        %v619 = vunpack.c.l.b16 %v459
        %v620 = vunpack.c.h.b16 %v459
        %v621 = vunpack.c.l.b16 %v460
        %v622 = vunpack.c.l.b16 %v461
        %v623 = vunpack.c.h.b16 %v461
        %v624 = vunpack.c.l.b16 %v462
        %v625 = vunpack.c.l.b16 %v463
        %v626 = vunpack.c.h.b16 %v463
        %v627 = vunpack.c.l.b16 %v464
        %v628 = vunpack.c.l.b16 %v465
        %v629 = vunpack.c.h.b16 %v465
        %v630 = vunpack.c.l.b16 %v466
        %v631 = vunpack.c.l.b16 %v467
        %v632 = vunpack.c.h.b16 %v467
        %v633 = vunpack.c.l.b16 %v468
        %v634 = vunpack.c.l.b16 %v469
        %v635 = vunpack.c.h.b16 %v469
        %v636 = vunpack.c.l.b16 %v470
        %v637 = vunpack.c.l.b16 %v471
        %v638 = vunpack.c.h.b16 %v471
        %v639 = vunpack.c.l.b16 %v472
        %v640 = vunpack.c.l.b16 %v473
        %v641 = vunpack.c.h.b16 %v473
        %v642 = vunpack.c.l.b16 %v474
        %v643 = vunpack.c.l.b16 %v475
        %v644 = vunpack.c.h.b16 %v475
        %v645 = vunpack.c.l.b16 %v476
        %v646 = vunpack.c.l.b16 %v477
        %v647 = vunpack.c.h.b16 %v477
        %v648 = vunpack.c.l.b16 %v478
        %v649 = vunpack.c.l.b16 %v479
        %v650 = vunpack.c.h.b16 %v479
        %v651 = vunpack.c.l.b16 %v480
        %v652 = vunpack.c.l.b16 %v481
        %v653 = vunpack.c.h.b16 %v481
        %v654 = vunpack.c.l.b16 %v482
        %v655 = vunpack.c.l.b16 %v483
        %v656 = vunpack.c.h.b16 %v483
        %v657 = vunpack.c.l.b16 %v484
        %v658 = vunpack.c.l.b16 %v485
        %v659 = vunpack.c.h.b16 %v485
        %v660 = vunpack.c.l.b16 %v486
        %v661 = vunpack.c.l.b16 %v487
        %v662 = vunpack.c.h.b16 %v487
        %v663 = vunpack.c.l.b16 %v488
        %v664 = vunpack.c.l.b16 %v489
        %v665 = vunpack.c.h.b16 %v489
        %v666 = vunpack.c.l.b16 %v490
        %v667 = vunpack.c.l.b16 %v491
        %v668 = vunpack.c.h.b16 %v491
        %v669 = vunpack.c.l.b16 %v492
        %v670 = vpack.c.b16 %v577, %v574
        %v671 = vpack.c.b16 %v578, %v575
        %v672 = vpack.c.b16 %v579, %v576
        %v673 = vpack.c.b16 %v583, %v580
        %v674 = vpack.c.b16 %v584, %v581
        %v675 = vpack.c.b16 %v585, %v582
        %v676 = vpack.c.b16 %v589, %v586
        %v677 = vpack.c.b16 %v590, %v587
        %v678 = vpack.c.b16 %v591, %v588
        %v679 = vpack.c.b16 %v595, %v592
        %v680 = vpack.c.b16 %v596, %v593
        %v681 = vpack.c.b16 %v597, %v594
        %v682 = vpack.c.b16 %v601, %v598
        %v683 = vpack.c.b16 %v602, %v599
        %v684 = vpack.c.b16 %v603, %v600
        %v685 = vpack.c.b16 %v607, %v604
        %v686 = vpack.c.b16 %v608, %v605
        %v687 = vpack.c.b16 %v609, %v606
        %v688 = vpack.c.b16 %v613, %v610
        %v689 = vpack.c.b16 %v614, %v611
        %v690 = vpack.c.b16 %v615, %v612
        %v691 = vpack.c.b16 %v619, %v616
        %v692 = vpack.c.b16 %v620, %v617
        %v693 = vpack.c.b16 %v621, %v618
        %v694 = vpack.c.b16 %v625, %v622
        %v695 = vpack.c.b16 %v626, %v623
        %v696 = vpack.c.b16 %v627, %v624
        %v697 = vpack.c.b16 %v631, %v628
        %v698 = vpack.c.b16 %v632, %v629
        %v699 = vpack.c.b16 %v633, %v630
        %v700 = vpack.c.b16 %v637, %v634
        %v701 = vpack.c.b16 %v638, %v635
        %v702 = vpack.c.b16 %v639, %v636
        %v703 = vpack.c.b16 %v643, %v640
        %v704 = vpack.c.b16 %v644, %v641
        %v705 = vpack.c.b16 %v645, %v642
        %v706 = vpack.c.b16 %v649, %v646
        %v707 = vpack.c.b16 %v650, %v647
        %v708 = vpack.c.b16 %v651, %v648
        %v709 = vpack.c.b16 %v655, %v652
        %v710 = vpack.c.b16 %v656, %v653
        %v711 = vpack.c.b16 %v657, %v654
        %v712 = vpack.c.b16 %v661, %v658
        %v713 = vpack.c.b16 %v662, %v659
        %v714 = vpack.c.b16 %v663, %v660
        %v715 = vpack.c.b16 %v667, %v664
        %v716 = vpack.c.b16 %v668, %v665
        %v717 = vpack.c.b16 %v669, %v666
        %766 = vmatprep.subr.bf16.mxu0 %v692
        %767 = vmatpush1.bf16.msra.mxu0 %v691
        %768 = vmatprep.subr.bf16.mxu0 %v689
        %769 = vmatpush1.bf16.msra.mxu0 %v688
        %770 = vmatprep.subr.bf16.mxu0 %v686
        %771 = vmatpush1.bf16.msra.mxu0 %v685
        %772 = vmatprep.subr.bf16.mxu0 %v683
        %773 = vmatpush1.bf16.msra.mxu0 %v682
        %774 = vmatprep.subr.bf16.mxu0 %v680
        %775 = vmatpush1.bf16.msra.mxu0 %v679
        %776 = vmatprep.subr.bf16.mxu0 %v677
        %777 = vmatpush1.bf16.msra.mxu0 %v676
        %778 = vmatprep.subr.bf16.mxu0 %v674
        %779 = vmatpush1.bf16.msra.mxu0 %v673
        %780 = vmatprep.subr.bf16.mxu0 %v671
        %781 = vmatpush1.bf16.msra.mxu0 %v670
        %782 = vmatprep.subr.bf16.mxu0 %v716
        %783 = vmatpush2.bf16.msra.mxu0 %v715
        %784 = vmatprep.subr.bf16.mxu0 %v713
        %785 = vmatpush2.bf16.msra.mxu0 %v712
        %786 = vmatprep.subr.bf16.mxu0 %v710
        %787 = vmatpush2.bf16.msra.mxu0 %v709
        %788 = vmatprep.subr.bf16.mxu0 %v707
        %789 = vmatpush2.bf16.msra.mxu0 %v706
        %790 = vmatprep.subr.bf16.mxu0 %v704
        %791 = vmatpush2.bf16.msra.mxu0 %v703
        %792 = vmatprep.subr.bf16.mxu0 %v701
        %793 = vmatpush2.bf16.msra.mxu0 %v700
        %794 = vmatprep.subr.bf16.mxu0 %v698
        %795 = vmatpush2.bf16.msra.mxu0 %v697
        %796 = vmatprep.subr.bf16.mxu0 %v695
        %797 = vmatpush2.bf16.msra.mxu0 %v694
        %798 = vmatprep.mubr.bf16.mxu0 %v428
        %799 = vmatmul.mubr.bf16.gmra.mxu0 %v427
        %v800 = vpop.f32.mrf.mxu0
        %v801 = vadd.f32 %v498, %v800
        %v802 = vpop.f32.mrf.mxu0
        %v803 = vadd.f32 %v502, %v802
        %v804 = vpop.f32.mrf.mxu0
        %v805 = vpop.f32.mrf.mxu0
        %806 = vdwg.mxu0
        %807 = vmatprep.subr.bf16.mxu0 0
        %808 = vmatpush1.bf16.msra.mxu0 %v693
        %809 = vmatprep.subr.bf16.mxu0 0
        %810 = vmatpush1.bf16.msra.mxu0 %v690
        %811 = vmatprep.subr.bf16.mxu0 0
        %812 = vmatpush1.bf16.msra.mxu0 %v687
        %813 = vmatprep.subr.bf16.mxu0 0
        %814 = vmatpush1.bf16.msra.mxu0 %v684
        %815 = vmatprep.subr.bf16.mxu0 0
        %816 = vmatpush1.bf16.msra.mxu0 %v681
        %817 = vmatprep.subr.bf16.mxu0 0
        %818 = vmatpush1.bf16.msra.mxu0 %v678
        %819 = vmatprep.subr.bf16.mxu0 0
        %820 = vmatpush1.bf16.msra.mxu0 %v675
        %821 = vmatprep.subr.bf16.mxu0 0
        %822 = vmatpush1.bf16.msra.mxu0 %v672
        %823 = vmatprep.subr.bf16.mxu0 0
        %824 = vmatpush2.bf16.msra.mxu0 %v717
        %825 = vmatprep.subr.bf16.mxu0 0
        %826 = vmatpush2.bf16.msra.mxu0 %v714
        %827 = vmatprep.subr.bf16.mxu0 0
        %828 = vmatpush2.bf16.msra.mxu0 %v711
        %829 = vmatprep.subr.bf16.mxu0 0
        %830 = vmatpush2.bf16.msra.mxu0 %v708
        %831 = vmatprep.subr.bf16.mxu0 0
        %832 = vmatpush2.bf16.msra.mxu0 %v705
        %833 = vmatprep.subr.bf16.mxu0 0
        %834 = vmatpush2.bf16.msra.mxu0 %v702
        %835 = vmatprep.subr.bf16.mxu0 0
        %836 = vmatpush2.bf16.msra.mxu0 %v699
        %837 = vmatprep.subr.bf16.mxu0 0
        %838 = vmatpush2.bf16.msra.mxu0 %v696
        %839 = vmatprep.mubr.bf16.mxu0 %v428
        %840 = vmatmul.mubr.bf16.gmra.mxu0 %v427
        %v841 = vpop.f32.mrf.mxu0
        %v842 = vadd.f32 %v506, %v841
        %v843 = vpop.f32.mrf.mxu0
        %v844 = vpop.f32.mrf.mxu0
        %v845 = vpop.f32.mrf.mxu0
        %846 = vdwg.mxu0
        %847 = vst [vmem:[%s268] sm:$0xff] %v801
        %848 = vst [vmem:[%s268 + $0x8] sm:$0xff] %v803
        %849 = vst [vmem:[%s268 + $0x10] sm:$0xff] %v842
        %s850 = sand.u32 %s141, 1
        %s851 = scalar_lea.sflag [#allocation5], %s850
        %s852 = sand.u32 %s141, 1
        %s853 = smul.addr %s852, 24
        %s854 = scalar_lea.vmem [#allocation9], %s853
        // Predicated region
        $region53: #{tpu_custom_call.1} parent=39 // pred_check
          %p855 = pneg %p151
        $region54: #{tpu_custom_call.1} parent=39 // pred_check_branch
          %857 = sbr.rel (%p855) target = $region56
        $region55: #{tpu_custom_call.1} parent=39 // pred_region
          %s859 = ssub.s32 384, 384
          %860 = vsyncadd %s851, %s859
          %s861 = smul.addr %s23, 3
          %s862 = smul.addr %s861, 128
          %s863 = scalar_lea.hbm %s5, %s862
          %s865 = sshll.u32 %s854, 4
          %s866 = int_to_ptr.vmem [resolvable:$true] %s865
          %868 = dma.vmem_to_hbm [thread:$0]  %s866, 384, %s863, %s851
        $region56: #{tpu_custom_call.1} parent=39 // pred_fallthru
          _
      $region40: #{tpu_custom_call.1} parent=5 // pred_fallthru
        _
      %p869 = scmp.le.s32.totalorder 2, %s18
      // Predicated region
      $region57: #{tpu_custom_call.1} parent=5 // pred_check
        %p870 = pneg %p869
      $region58: #{tpu_custom_call.1} parent=5 // pred_check_branch
        %872 = sbr.rel (%p870) target = $region60
      $region59: #{tpu_custom_call.1} parent=5 // pred_region
        %s873 = ssub.s32 %s18, 2
        // Predicated region
        $region61: #{tpu_custom_call.1} parent=59 // pred_check
          %p874 = pneg %p157
        $region62: #{tpu_custom_call.1} parent=59 // pred_check_branch
          %876 = sbr.rel (%p874) target = $region64
        $region63: #{tpu_custom_call.1} parent=59 // pred_region
          %s877 = sand.u32 %s142, 1
          %s878 = scalar_lea.sflag [#allocation5], %s877
          %s879 = sand.u32 %s142, 1
          %s880 = smul.addr %s879, 24
          %s881 = scalar_lea.vmem [#allocation9], %s880
          %882 = dma.done %s878, 384
        $region64: #{tpu_custom_call.1} parent=59 // pred_fallthru
          _
      $region60: #{tpu_custom_call.1} parent=5 // pred_fallthru
        _
    $region6: #{tpu_custom_call.1} parent=1 // loop_footer
      %s22 = sadd.s32 1, %s18
    $region7: #{tpu_custom_call.1} parent=1 // loop_footer_branch
      %17 = sbr.rel target = $region3
    $region8: #{tpu_custom_call.1} parent=1 // loop_exit
      _
    %883 = vsyncpa [#allocation4], 1
    %s884 = scalar_lea.sflag [#allocation4], 1
    %885 = vsyncpa %s884, 1
    %886 = vsyncpa [#allocation7], 1
    %887 = vsyncpa [#allocation5], 1
    %s888 = scalar_lea.sflag [#allocation5], 1
    %889 = vsyncpa %s888, 1

</llo_original>
